<compile_context>
chip_gen: v7x
topology: tpu7x:2x2x1
jax: 0.10.0
libtpu: 0.0.40
codegen_flags: <defaults>
</compile_context>

<pallas_src>
import math
import functools

import jax
import jax.numpy as jnp
from jax import lax
from jax.experimental import pallas as pl
from jax.experimental.pallas import tpu as pltpu


# ---------------------------------------------------------------------------
# Kernel 1: fused QKV projection (computed once; hoisted out of attention).
# ---------------------------------------------------------------------------
def _qkv_proj_kernel(x_ref, w_in_ref, b_in_ref, q_ref, k_ref, v_ref, *, scale):
    x = x_ref[...]                        # (TM, C)  bf16
    w = w_in_ref[...]                     # (C, 3C)  bf16, pre-transposed
    b = b_in_ref[...]                     # (1, 3C)  f32
    C = x.shape[1]
    qkv = jnp.dot(x, w, preferred_element_type=jnp.float32) + b      # (TM, 3C) f32
    # Fold the attention scale into Q here; cast each piece to bf16 right away
    # so only one f32 temporary is live.
    q_ref[...] = (qkv[:, :C] * scale).astype(q_ref.dtype)
    k_ref[...] = qkv[:, C:2 * C].astype(k_ref.dtype)
    v_ref[...] = qkv[:, 2 * C:].astype(v_ref.dtype)


# ---------------------------------------------------------------------------
# Kernel 2: flash-style causal attention + fused output projection.
# Grid = (B, n_q, n_kv); kv axis last and "arbitrary" (online-softmax carry).
# ---------------------------------------------------------------------------
def _flash_attn_kernel(q_ref, k_ref, v_ref, w_out_ref, b_out_ref, o_ref,
                       acc_ref, m_ref, l_ref, *, n_head, q_tile, kv_tile):
    qi = pl.program_id(1)
    ki = pl.program_id(2)
    n_kv = pl.num_programs(2)

    C = q_ref.shape[-1]
    D = C // n_head

    @pl.when(ki == 0)
    def _init():
        m_ref[...] = jnp.full_like(m_ref, -jnp.inf)
        l_ref[...] = jnp.zeros_like(l_ref)
        acc_ref[...] = jnp.zeros_like(acc_ref)

    q0 = qi * q_tile                      # global query offset of this tile
    k0 = ki * kv_tile                     # global key offset of this tile

    # Skip KV tiles that lie entirely above the causal diagonal (no MXU / EUP
    # work for the ~half of tiles that would be fully masked).
    @pl.when(k0 <= q0 + q_tile - 1)
    def _compute():
        q = q_ref[0]                      # (TQ, C) bf16, already scaled
        k = k_ref[0]                      # (TK, C) bf16
        v = v_ref[0]                      # (TK, C) bf16

        # Causal mask for this (q-tile, kv-tile) pair; hoisted out of the head
        # loop.  (Cheap VPU select; the expensive fully-masked tiles are
        # already skipped above.)
        row = lax.broadcasted_iota(jnp.int32, (q_tile, kv_tile), 0) + q0
        col = lax.broadcasted_iota(jnp.int32, (q_tile, kv_tile), 1) + k0
        causal = col <= row

        # Static head loop (n_head is small); each head's temporaries die on
        # the scratch write, and the running state lives in VMEM scratch.
        for h in range(n_head):
            sl = slice(h * D, (h + 1) * D)
            # Q . K^T without transposing K: contract the head dims on the MXU.
            s = lax.dot_general(q[:, sl], k[:, sl], (((1,), (1,)), ((), ())),
                                preferred_element_type=jnp.float32)   # (TQ, TK)
            s = jnp.where(causal, s, jnp.float32(-1e30))

            m_prev = m_ref[:, h:h + 1]    # (TQ, 1) f32
            l_prev = l_ref[:, h:h + 1]
            m_new = jnp.maximum(m_prev, jnp.max(s, axis=-1, keepdims=True))
            alpha = jnp.exp(m_prev - m_new)
            p = jnp.exp(s - m_new)        # f32 softmax numerics
            l_ref[:, h:h + 1] = alpha * l_prev + jnp.sum(p, axis=-1, keepdims=True)
            m_ref[:, h:h + 1] = m_new

            pv = jnp.dot(p.astype(jnp.bfloat16), v[:, sl],
                         preferred_element_type=jnp.float32)          # (TQ, D)
            # Lane-dense (TQ, C) accumulator; head h owns columns h*D:(h+1)*D.
            # TODO(synk): on v5e, pair heads into 128-lane-aligned column
            # writes to avoid masked vst on the single store slot.
            acc_ref[:, sl] = alpha * acc_ref[:, sl] + pv

    @pl.when(ki == n_kv - 1)
    def _finalize():
        # Exact per-head softmax normalization (done once per query tile),
        # then ONE full-depth (TQ, C) @ (C, C) output projection so the MXU
        # contraction depth is C instead of D.
        for h in range(n_head):
            sl = slice(h * D, (h + 1) * D)
            acc_ref[:, sl] = acc_ref[:, sl] / l_ref[:, h:h + 1]
        y = jnp.dot(acc_ref[...].astype(jnp.bfloat16), w_out_ref[...],
                    preferred_element_type=jnp.float32) + b_out_ref[...]
        o_ref[0] = y.astype(o_ref.dtype)


def causal_self_attention(x, w_in, b_in, w_out, b_out, *, n_head: int,
                          q_tile: int | None = None, kv_tile: int | None = None):
    """x: (B, T, C); w_in: (3C, C); b_in: (3C,); w_out: (C, C); b_out: (C,)."""
    B, T, C = x.shape
    assert C % n_head == 0
    D = C // n_head
    out_itemsize = jnp.dtype(x.dtype).itemsize

    # Tile sizes.  128 is MXU / lane friendly and fits v7x's 64 MiB VMEM;
    # on v6e (128 MiB VMEM, 256-deep MXU) q_tile=256 / kv_tile=512 can be
    # passed explicitly.  Fall back to full T for small / non-aligned T.
    if q_tile is None:
        q_tile = 128 if (T % 128 == 0) else T
    if kv_tile is None:
        kv_tile = 128 if (T % 128 == 0) else T
    assert T % q_tile == 0 and T % kv_tile == 0
    n_q = T // q_tile
    n_kv = T // kv_tile

    # Pre-transpose weights once (no in-kernel XLU transposes) and cast matmul
    # operands to bf16 (half the DMA, full-rate MXU); biases stay f32.
    x_flat = x.reshape(B * T, C).astype(jnp.bfloat16)
    w_in_t = jnp.transpose(w_in).astype(jnp.bfloat16)       # (C, 3C)
    w_out_t = jnp.transpose(w_out).astype(jnp.bfloat16)     # (C, C)
    b_in2 = b_in.reshape(1, 3 * C).astype(jnp.float32)
    b_out2 = b_out.reshape(1, C).astype(jnp.float32)

    # ---------------- QKV projection (hoisted, computed once) ----------------
    M = B * T
    if M % 256 == 0:
        tm = 256
    elif M % 128 == 0:
        tm = 128
    else:
        tm = M                                               # small-shape fallback

    proj_flops = 2 * M * C * 3 * C
    proj_bytes = M * C * 2 + C * 3 * C * 2 + 3 * C * 4 + 3 * M * C * 2

    q_flat, k_flat, v_flat = pl.pallas_call(
        functools.partial(_qkv_proj_kernel, scale=1.0 / math.sqrt(D)),
        out_shape=(jax.ShapeDtypeStruct((M, C), jnp.bfloat16),
                   jax.ShapeDtypeStruct((M, C), jnp.bfloat16),
                   jax.ShapeDtypeStruct((M, C), jnp.bfloat16)),
        grid_spec=pltpu.PrefetchScalarGridSpec(
            num_scalar_prefetch=0,
            grid=(M // tm,),
            in_specs=[
                pl.BlockSpec((tm, C), lambda i: (i, 0)),          # x rows
                pl.BlockSpec((C, 3 * C), lambda i: (0, 0)),       # w_in^T
                pl.BlockSpec((1, 3 * C), lambda i: (0, 0)),       # b_in
            ],
            out_specs=[
                pl.BlockSpec((tm, C), lambda i: (i, 0)),
                pl.BlockSpec((tm, C), lambda i: (i, 0)),
                pl.BlockSpec((tm, C), lambda i: (i, 0)),
            ],
        ),
        compiler_params=pltpu.CompilerParams(dimension_semantics=("parallel",)),
        cost_estimate=pl.CostEstimate(flops=int(proj_flops), transcendentals=0,
                                      bytes_accessed=int(proj_bytes)),
    )(x_flat, w_in_t, b_in2)

    q = q_flat.reshape(B, T, C)
    k = k_flat.reshape(B, T, C)
    v = v_flat.reshape(B, T, C)

    # ------------------------- Flash attention call --------------------------
    def q_map(b, qi, ki):
        return (b, qi, 0)

    def kv_map(b, qi, ki):
        # Clamp to the last KV block this query tile actually needs: for tiles
        # above the causal diagonal the block index is unchanged vs. the
        # previous step, so Pallas skips the redundant DMA.
        last = (qi * q_tile + q_tile - 1) // kv_tile
        return (b, jnp.minimum(ki, last), 0)

    def const_map(b, qi, ki):
        return (0, 0)

    def o_map(b, qi, ki):
        return (b, qi, 0)

    # Advisory cost estimate (causal halves the QK^T / PV work).
    attn_flops = int(B * (2 * T * T * C + 2 * T * C * C))
    attn_trans = int(B * n_head * T * T // 2)
    attn_bytes = int(B * T * C * 2 * (1 + n_kv)          # q once, k/v ~triangular
                     + C * C * 2 + C * 4
                     + B * T * C * out_itemsize)

    # Explicit scoped-VMEM budget: double-buffered blocks + scratch + in-kernel
    # temporaries with margin, capped conservatively (review: <= ~48 MiB; on
    # v7x leave headroom below the 64 MiB per-TC capacity).
    block_bytes = ((q_tile * C + 2 * kv_tile * C + C * C) * 2   # bf16 blocks
                   + C * 4                                      # b_out
                   + q_tile * C * out_itemsize)                 # output block
    scratch_bytes = q_tile * C * 4 + 2 * q_tile * max(n_head, 128) * 4
    temp_bytes = 6 * q_tile * kv_tile * 4
    try:
        vmem_cap = pltpu.get_tpu_info().vmem_capacity_bytes
    except Exception:
        vmem_cap = 64 * 2**20
    vmem_limit = int(min(
        max(2 * (2 * block_bytes + scratch_bytes + temp_bytes), 8 * 2**20),
        48 * 2**20,
        max(vmem_cap - 16 * 2**20, 16 * 2**20)))

    kernel = functools.partial(_flash_attn_kernel, n_head=n_head,
                               q_tile=q_tile, kv_tile=kv_tile)

    # TODO(synk): attn_dropout / resid_dropout are identity in eval mode
    # (dropout_p = 0) and are intentionally omitted.
    # TODO(synk): grid-invariant w_out^T / b_out could be single-buffered with
    # pipeline_mode=pl.Buffered(1) once that is universally supported; they are
    # only DMA'd once either way (constant block index), the cost is one spare
    # VMEM buffer each.
    # Note (v7x megacore): B * n_q should be even so both TensorCores get an
    # equal shard of the ("parallel", "parallel") axes.
    return pl.pallas_call(
        kernel,
        out_shape=jax.ShapeDtypeStruct((B, T, C), x.dtype),
        grid_spec=pltpu.PrefetchScalarGridSpec(
            num_scalar_prefetch=0,
            grid=(B, n_q, n_kv),
            in_specs=[
                pl.BlockSpec((1, q_tile, C), q_map),       # Q tile (pre-scaled)
                pl.BlockSpec((1, kv_tile, C), kv_map),     # K tile
                pl.BlockSpec((1, kv_tile, C), kv_map),     # V tile
                pl.BlockSpec((C, C), const_map),           # w_out^T
                pl.BlockSpec((1, C), const_map),           # b_out
            ],
            out_specs=pl.BlockSpec((1, q_tile, C), o_map),
            scratch_shapes=[
                pltpu.VMEM((q_tile, C), jnp.float32),          # acc (per-head cols)
                pltpu.VMEM((q_tile, n_head), jnp.float32),     # running max m
                pltpu.VMEM((q_tile, n_head), jnp.float32),     # running sum l
            ],
        ),
        compiler_params=pltpu.CompilerParams(
            dimension_semantics=("parallel", "parallel", "arbitrary"),
            vmem_limit_bytes=vmem_limit,
        ),
        cost_estimate=pl.CostEstimate(flops=attn_flops,
                                      transcendentals=attn_trans,
                                      bytes_accessed=attn_bytes),
    )(q, k, v, w_out_t, b_out2)


def _reference(x, w_in, b_in, w_out, b_out, n_head):
    B, T, C = x.shape
    D = C // n_head
    qkv = jnp.einsum("btc,oc->bto", x, w_in) + b_in
    q, k, v = jnp.split(qkv, 3, axis=-1)

    def heads(t):
        return t.reshape(B, T, n_head, D).transpose(0, 2, 1, 3)  # (B, H, T, D)

    q, k, v = heads(q), heads(k), heads(v)
    s = jnp.einsum("bhtd,bhsd->bhts", q, k) / math.sqrt(D)
    mask = jnp.tril(jnp.ones((T, T), dtype=bool))
    s = jnp.where(mask, s, -1e30)
    p = jax.nn.softmax(s, axis=-1)
    o = jnp.einsum("bhts,bhsd->bhtd", p, v)
    o = o.transpose(0, 2, 1, 3).reshape(B, T, C)
    return jnp.einsum("btc,oc->bto", o, w_out) + b_out


if __name__ == "__main__":
    # Small config implied by the module: model_dim=C, n_head, bias=True.
    B, T, C, n_head = 2, 8, 32, 4

    key = jax.random.PRNGKey(0)
    kx, kw1, kb1, kw2, kb2 = jax.random.split(key, 5)
    x = jax.random.normal(kx, (B, T, C), dtype=jnp.float32)
    w_in = jax.random.normal(kw1, (3 * C, C), dtype=jnp.float32) * 0.02
    b_in = jax.random.normal(kb1, (3 * C,), dtype=jnp.float32) * 0.02
    w_out = jax.random.normal(kw2, (C, C), dtype=jnp.float32) * 0.02
    b_out = jax.random.normal(kb2, (C,), dtype=jnp.float32) * 0.02

    out = causal_self_attention(x, w_in, b_in, w_out, b_out, n_head=n_head)
    out = jax.block_until_ready(out)

    ref = _reference(x, w_in, b_in, w_out, b_out, n_head)
    assert out.shape == (B, T, C)
    # bf16 matmul operands (f32 accumulation / f32 softmax) -> loosened tolerance.
    assert jnp.allclose(out, ref, atol=1e-2, rtol=1e-2), "mismatch vs reference"

    print("KERNEL_OK")
</pallas_src>

<mosaic_0001>
module attributes {stable_mosaic.version = 11 : i64} {
  func.func @_qkv_proj_kernel(%arg0: i32, %arg1: memref<16x32xbf16, #tpu.memory_space<vmem>>, %arg2: memref<32x96xbf16, #tpu.memory_space<vmem>>, %arg3: memref<1x96xf32, #tpu.memory_space<vmem>>, %arg4: memref<16x32xbf16, #tpu.memory_space<vmem>>, %arg5: memref<16x32xbf16, #tpu.memory_space<vmem>>, %arg6: memref<16x32xbf16, #tpu.memory_space<vmem>>) attributes {dimension_semantics = [#tpu.dimension_semantics<parallel>], iteration_bounds = array<i64: 1>, scalar_prefetch = 0 : i64, scratch_operands = 0 : i64, tpu.core_type = #tpu.core_type<tc>, window_params = [{transform_indices = @transform_0, window_bounds = array<i64: 16, 32>}, {pipeline_mode = #tpu.pipeline_mode<synchronous>, transform_indices = @transform_1, window_bounds = array<i64: 32, 96>}, {pipeline_mode = #tpu.pipeline_mode<synchronous>, transform_indices = @transform_2, window_bounds = array<i64: 1, 96>}, {transform_indices = @transform_3, window_bounds = array<i64: 16, 32>}, {transform_indices = @transform_4, window_bounds = array<i64: 16, 32>}, {transform_indices = @transform_5, window_bounds = array<i64: 16, 32>}]} {
    %c0 = arith.constant 0 : index
    %c0_0 = arith.constant 0 : index
    %0 = vector.load %arg1[%c0, %c0_0] : memref<16x32xbf16, #tpu.memory_space<vmem>>, vector<16x32xbf16>
    %c0_1 = arith.constant 0 : index
    %c0_2 = arith.constant 0 : index
    %1 = vector.load %arg2[%c0_1, %c0_2] : memref<32x96xbf16, #tpu.memory_space<vmem>>, vector<32x96xbf16>
    %c0_3 = arith.constant 0 : index
    %c0_4 = arith.constant 0 : index
    %2 = vector.load %arg3[%c0_3, %c0_4] : memref<1x96xf32, #tpu.memory_space<vmem>>, vector<1x96xf32>
    %cst = arith.constant dense<0.000000e+00> : vector<16x96xf32>
    %3 = tpu.matmul %0, %1, %cst {dimension_numbers = #tpu.dot_dimension_numbers<[1], [0], [0], [1], [0, 0, 1, 1], [], []>} : vector<16x32xbf16>, vector<32x96xbf16>, vector<16x96xf32> -> vector<16x96xf32>
    %4 = vector.broadcast %2 : vector<1x96xf32> to vector<16x96xf32>
    %5 = arith.addf %3, %4 : vector<16x96xf32>
    %6 = vector.extract_strided_slice %5 {offsets = [0, 0], sizes = [16, 32], strides = [1, 1]} : vector<16x96xf32> to vector<16x32xf32>
    %cst_5 = arith.constant 0.353553385 : f32
    %7 = vector.broadcast %cst_5 : f32 to vector<16x32xf32>
    %8 = arith.mulf %6, %7 : vector<16x32xf32>
    %9 = arith.truncf %8 : vector<16x32xf32> to vector<16x32xbf16>
    %c0_6 = arith.constant 0 : index
    %c0_7 = arith.constant 0 : index
    %10 = vector.load %arg4[%c0_6, %c0_7] : memref<16x32xbf16, #tpu.memory_space<vmem>>, vector<16x32xbf16>
    tpu.vector_store %arg4[%c0_6, %c0_7], %9 {strides = array<i32>} : memref<16x32xbf16, #tpu.memory_space<vmem>>, vector<16x32xbf16>,
    %11 = vector.extract_strided_slice %5 {offsets = [0, 32], sizes = [16, 32], strides = [1, 1]} : vector<16x96xf32> to vector<16x32xf32>
    %12 = arith.truncf %11 : vector<16x32xf32> to vector<16x32xbf16>
    %c0_8 = arith.constant 0 : index
    %c0_9 = arith.constant 0 : index
    %13 = vector.load %arg5[%c0_8, %c0_9] : memref<16x32xbf16, #tpu.memory_space<vmem>>, vector<16x32xbf16>
    tpu.vector_store %arg5[%c0_8, %c0_9], %12 {strides = array<i32>} : memref<16x32xbf16, #tpu.memory_space<vmem>>, vector<16x32xbf16>,
    %14 = vector.extract_strided_slice %5 {offsets = [0, 64], sizes = [16, 32], strides = [1, 1]} : vector<16x96xf32> to vector<16x32xf32>
    %15 = arith.truncf %14 : vector<16x32xf32> to vector<16x32xbf16>
    %c0_10 = arith.constant 0 : index
    %c0_11 = arith.constant 0 : index
    %16 = vector.load %arg6[%c0_10, %c0_11] : memref<16x32xbf16, #tpu.memory_space<vmem>>, vector<16x32xbf16>
    tpu.vector_store %arg6[%c0_10, %c0_11], %15 {strides = array<i32>} : memref<16x32xbf16, #tpu.memory_space<vmem>>, vector<16x32xbf16>,
    return
  }
  func.func @transform_0(%arg0: i32) -> (i32, i32) {
    %c0_i32 = arith.constant 0 : i32
    %c0_i32_0 = arith.constant 0 : i32
    return %arg0, %c0_i32 : i32, i32
  }
  func.func @transform_1(%arg0: i32) -> (i32, i32) {
    %c0_i32 = arith.constant 0 : i32
    %c0_i32_0 = arith.constant 0 : i32
    %c0_i32_1 = arith.constant 0 : i32
    return %c0_i32, %c0_i32_0 : i32, i32
  }
  func.func @transform_2(%arg0: i32) -> (i32, i32) {
    %c0_i32 = arith.constant 0 : i32
    %c0_i32_0 = arith.constant 0 : i32
    %c0_i32_1 = arith.constant 0 : i32
    return %c0_i32, %c0_i32_0 : i32, i32
  }
  func.func @transform_3(%arg0: i32) -> (i32, i32) {
    %c0_i32 = arith.constant 0 : i32
    %c0_i32_0 = arith.constant 0 : i32
    return %arg0, %c0_i32 : i32, i32
  }
  func.func @transform_4(%arg0: i32) -> (i32, i32) {
    %c0_i32 = arith.constant 0 : i32
    %c0_i32_0 = arith.constant 0 : i32
    return %arg0, %c0_i32 : i32, i32
  }
  func.func @transform_5(%arg0: i32) -> (i32, i32) {
    %c0_i32 = arith.constant 0 : i32
    %c0_i32_0 = arith.constant 0 : i32
    return %arg0, %c0_i32 : i32, i32
  }
}

</mosaic_0001>

<llo_original>
// kernel: tpu_custom_call.1
$region0: #{tpu_custom_call.1}
  #allocation0 [shape = 'u32[]', space=smem, size = 0x4, offset = 0x4, fixed_abs, tag = 'smem constant byte address 0x4 - core index']
  #allocation1 [shape = 'u32[144,128]{1,0:T(1,128)}', space=vmem, size = 0x12000, scoped, tag = 'internal scratch']
  %s0 = inlined_call_operand.hbm [shape: bf16[16,32], index: 0, kind: input, shape index: {}]
  %s1 = inlined_call_operand.hbm [shape: bf16[32,96], index: 1, kind: input, shape index: {}]
  %s2 = inlined_call_operand.vmem [shape: f32[1,96], index: 2, kind: input, shape index: {}]
  %s3 = inlined_call_operand.hbm [shape: bf16[16,32], index: 3, kind: output, shape index: {0}]
  %s4 = inlined_call_operand.hbm [shape: bf16[16,32], index: 4, kind: output, shape index: {1}]
  %s5 = inlined_call_operand.hbm [shape: bf16[16,32], index: 5, kind: output, shape index: {2}]
  %6 = xla_tuple %s3, %s4, %s5
  %s7 = sld [smem:[#allocation0]]
  $region46: #{tpu_custom_call.1} parent=0
    _
  %s9 = ssub.s32 1, %s7
  %s10 = scalar_select 0, %s9, %s7
  $region1: #{tpu_custom_call.1} parent=0
    #allocation2 [shape = 'u8[4096]{0}', space=vmem, size = 0x1000, scoped, tag = 'input window, operand 0, single buffered']
    #allocation3 [shape = 's32[1]{0}', space=sflag, size = 0x4, scoped, tag = 'scoped memory for tpu_custom_call.1']
    #allocation4 [shape = 's32[1]{0}', space=sflag, size = 0x4, scoped, tag = 'scoped memory for tpu_custom_call.1']
    #allocation5 [shape = 'u8[8192]{0}', space=vmem, size = 0x2000, scoped, tag = 'input window, operand 1, single buffered']
    #allocation6 [shape = 's32[1]{0}', space=sflag, size = 0x4, scoped, tag = 'scoped memory for tpu_custom_call.1']
    #allocation7 [shape = 'u8[4096]{0}', space=vmem, size = 0x1000, scoped, tag = 'output window, operand 0, single buffered']
    #allocation8 [shape = 'u8[4096]{0}', space=vmem, size = 0x1000, scoped, tag = 'output window, operand 1, single buffered']
    #allocation9 [shape = 's32[1]{0}', space=sflag, size = 0x4, scoped, tag = 'scoped memory for tpu_custom_call.1']
    #allocation10 [shape = 'u8[4096]{0}', space=vmem, size = 0x1000, scoped, tag = 'output window, operand 2, single buffered']
    %11 = vsyncpa [#allocation3], 0
    %12 = vsyncpa [#allocation6], 0
    %13 = vsyncpa [#allocation4], 0
    %14 = vsyncpa [#allocation9], 0
    // Predicated region
    $region2: #{tpu_custom_call.1} parent=1 // pred_check
      _
    $region3: #{tpu_custom_call.1} parent=1 // pred_check_branch
      %16 = sbr.rel (0) target = $region5
    $region4: #{tpu_custom_call.1} parent=1 // pred_region
      %s18 = ssub.s32 128, 128
      %19 = vsyncadd [#allocation3], %s18
      %s20 = sshll.u32 [#allocation2], 4
      %s21 = int_to_ptr.vmem [resolvable:$true] %s20
      %26 = dma.hbm_to_vmem [thread:$0]  %s0, 128, %s21, [#allocation3], 64, 64, 4
    $region5: #{tpu_custom_call.1} parent=1 // pred_fallthru
      _
    // Predicated region
    $region6: #{tpu_custom_call.1} parent=1 // pred_check
      _
    $region7: #{tpu_custom_call.1} parent=1 // pred_check_branch
      %28 = sbr.rel (0) target = $region9
    $region8: #{tpu_custom_call.1} parent=1 // pred_region
      %s30 = ssub.s32 256, 256
      %31 = vsyncadd [#allocation6], %s30
      %s32 = sshll.u32 [#allocation5], 4
      %s33 = int_to_ptr.vmem [resolvable:$true] %s32
      %38 = dma.hbm_to_vmem [thread:$0]  %s1, 256, %s33, [#allocation6], 64, 64, 4
    $region9: #{tpu_custom_call.1} parent=1 // pred_fallthru
      _
    // Predicated region
    $region10: #{tpu_custom_call.1} parent=1 // pred_check
      _
    $region11: #{tpu_custom_call.1} parent=1 // pred_check_branch
      %40 = sbr.rel (0) target = $region13
    $region12: #{tpu_custom_call.1} parent=1 // pred_region
      _
    $region13: #{tpu_custom_call.1} parent=1 // pred_fallthru
      _
    // Predicated region
    $region14: #{tpu_custom_call.1} parent=1 // pred_check
      _
    $region15: #{tpu_custom_call.1} parent=1 // pred_check_branch
      %42 = sbr.rel (0) target = $region17
    $region16: #{tpu_custom_call.1} parent=1 // pred_region
      %43 = dma.done [#allocation3], 128
    $region17: #{tpu_custom_call.1} parent=1 // pred_fallthru
      _
    // Predicated region
    $region18: #{tpu_custom_call.1} parent=1 // pred_check
      _
    $region19: #{tpu_custom_call.1} parent=1 // pred_check_branch
      %45 = sbr.rel (0) target = $region21
    $region20: #{tpu_custom_call.1} parent=1 // pred_region
      %46 = dma.done [#allocation6], 256
    $region21: #{tpu_custom_call.1} parent=1 // pred_fallthru
      _
    %v48 = vld [vmem:[#allocation2] sm:$0xf]
    %v49 = vld [vmem:[#allocation2 + $0x4] sm:$0xf]
    %v50 = vld [vmem:[#allocation5] sm:$0xf]
    %v51 = vld [vmem:[#allocation5 + $0x4] sm:$0xf]
    %v52 = vld [vmem:[#allocation5 + $0x8] sm:$0xf]
    %v53 = vld [vmem:[#allocation5 + $0xc] sm:$0xf]
    %v54 = vld [vmem:[%s2] sm:$0x1]
    %v56 = vlaneseq
    %v57 = vshrl.u32 %v56, 7
    %v58 = vsub.s32 0, %v57
    %v59 = vrot.slane %v54, %v58
    %v63 = vunpack.c.l.b16 %v48
    %v64 = vunpack.c.l.b16 %v49
    %v65 = vpack.c.b16 %v64, %v63
    %v70 = vunpack.c.l.b16 %v50
    %v71 = vunpack.c.l.b16 %v51
    %v72 = vunpack.c.l.b16 %v52
    %v73 = vunpack.c.l.b16 %v53
    %v74 = vpack.c.b16 %v71, %v70
    %v75 = vpack.c.b16 %v73, %v72
    %vm78 = vcmask 261120
    %v80 = vsel %vm78, %v65, 0
    %82 = vmatprep.subr.bf16.mxu0 0
    %83 = vmatpush1.bf16.msra.mxu0 %v74
    %84 = vmatprep.subr.bf16.mxu0 0
    %85 = vmatpush1.bf16.msra.mxu0 %v75
    %86 = vmatprep.subr.bf16.mxu0 0
    %87 = vmatpush1.bf16.msra.mxu0 0
    %88 = vmatprep.subr.bf16.mxu0 0
    %89 = vmatpush1.bf16.msra.mxu0 0
    %90 = vmatprep.subr.bf16.mxu0 0
    %91 = vmatpush1.bf16.msra.mxu0 0
    %92 = vmatprep.subr.bf16.mxu0 0
    %93 = vmatpush1.bf16.msra.mxu0 0
    %94 = vmatprep.subr.bf16.mxu0 0
    %95 = vmatpush1.bf16.msra.mxu0 0
    %96 = vmatprep.subr.bf16.mxu0 0
    %97 = vmatpush1.bf16.msra.mxu0 0
    %98 = vmatprep.subr.bf16.mxu0 0
    %99 = vmatpush1.bf16.msra.mxu0 0
    %100 = vmatprep.subr.bf16.mxu0 0
    %101 = vmatpush1.bf16.msra.mxu0 0
    %102 = vmatprep.subr.bf16.mxu0 0
    %103 = vmatpush1.bf16.msra.mxu0 0
    %104 = vmatprep.subr.bf16.mxu0 0
    %105 = vmatpush1.bf16.msra.mxu0 0
    %106 = vmatprep.subr.bf16.mxu0 0
    %107 = vmatpush1.bf16.msra.mxu0 0
    %108 = vmatprep.subr.bf16.mxu0 0
    %109 = vmatpush1.bf16.msra.mxu0 0
    %110 = vmatprep.subr.bf16.mxu0 0
    %111 = vmatpush1.bf16.msra.mxu0 0
    %112 = vmatprep.subr.bf16.mxu0 0
    %113 = vmatpush1.bf16.msra.mxu0 0
    %114 = vmatprep.mubr.bf16.mxu0 0
    %115 = vmatmul.mubr.bf16.gmra.mrb[0].mxu0 %v80
    %v116 = vpop.f32.mrb[0].mxu0
    %v117 = vadd.f32 %v59, %v116
    %v118 = vpop.f32.mrb[0].mxu0
    %v119 = vpop.f32.mrb[0].mxu0
    %v120 = vadd.f32 %v59, %v119
    %v121 = vpop.f32.mrb[0].mxu0
    %122 = vdwg.mxu0
    %v123 = vmul.f32 %v117, 0.35355338
    %v124 = vmul.f32 %v120, 0.35355338
    %v125 = vpack.c.bf16 %v124, %v123
    %v127 = vunpack.c.l.b16 %v125
    %v128 = vunpack.c.h.b16 %v125
    %v129 = vpack.c.b16 %v127, %v127
    %v130 = vpack.c.b16 %v128, %v128
    %vm133 = vcmask 257024
    %134 = vst.msk [vmem:[#allocation7] sm:$0xf] %vm133, %v129
    %135 = vst.msk [vmem:[#allocation7 + $0x4] sm:$0xf] %vm133, %v130
    %v136 = vpack.c.bf16 %v120, %v117
    %v138 = vunpack.c.l.b16 %v136
    %v139 = vunpack.c.h.b16 %v136
    %v140 = vpack.c.b16 %v138, %v138
    %v141 = vpack.c.b16 %v139, %v139
    %142 = vrot.lane.b32.xlu0 %v140, 96
    %v143 = vpop.permute.xlu0 %142
    %144 = vrot.lane.b32.xlu0 %v141, 96
    %v145 = vpop.permute.xlu0 %144
    %148 = vst.msk [vmem:[#allocation8] sm:$0xf] %vm133, %v143
    %149 = vst.msk [vmem:[#allocation8 + $0x4] sm:$0xf] %vm133, %v145
    %150 = vrot.lane.b32.xlu0 %v140, 64
    %v151 = vpop.permute.xlu0 %150
    %152 = vrot.lane.b32.xlu0 %v141, 64
    %v153 = vpop.permute.xlu0 %152
    %156 = vst.msk [vmem:[#allocation10] sm:$0xf] %vm133, %v151
    %157 = vst.msk [vmem:[#allocation10 + $0x4] sm:$0xf] %vm133, %v153
    // Predicated region
    $region22: #{tpu_custom_call.1} parent=1 // pred_check
      _
    $region23: #{tpu_custom_call.1} parent=1 // pred_check_branch
      %159 = sbr.rel (0) target = $region25
    $region24: #{tpu_custom_call.1} parent=1 // pred_region
      %s161 = ssub.s32 128, 128
      %162 = vsyncadd [#allocation4], %s161
      %s163 = sshll.u32 [#allocation7], 4
      %s164 = int_to_ptr.vmem [resolvable:$true] %s163
      %169 = dma.vmem_to_hbm [thread:$0]  %s164, 128, %s3, [#allocation4], 64, 64, 4
    $region25: #{tpu_custom_call.1} parent=1 // pred_fallthru
      _
    // Predicated region
    $region26: #{tpu_custom_call.1} parent=1 // pred_check
      _
    $region27: #{tpu_custom_call.1} parent=1 // pred_check_branch
      %171 = sbr.rel (0) target = $region29
    $region28: #{tpu_custom_call.1} parent=1 // pred_region
      %s173 = ssub.s32 128, 128
      %174 = vsyncadd [#allocation9], %s173
      %s175 = sshll.u32 [#allocation8], 4
      %s176 = int_to_ptr.vmem [resolvable:$true] %s175
      %181 = dma.vmem_to_hbm [thread:$0]  %s176, 128, %s4, [#allocation9], 64, 64, 4
    $region29: #{tpu_custom_call.1} parent=1 // pred_fallthru
      _
    // Predicated region
    $region30: #{tpu_custom_call.1} parent=1 // pred_check
      _
    $region31: #{tpu_custom_call.1} parent=1 // pred_check_branch
      %183 = sbr.rel (0) target = $region33
    $region32: #{tpu_custom_call.1} parent=1 // pred_region
      %s185 = ssub.s32 128, 128
      %186 = vsyncadd [#allocation9], %s185
      %s187 = sshll.u32 [#allocation10], 4
      %s188 = int_to_ptr.vmem [resolvable:$true] %s187
      %193 = dma.vmem_to_hbm [thread:$0]  %s188, 128, %s5, [#allocation9], 64, 64, 4
    $region33: #{tpu_custom_call.1} parent=1 // pred_fallthru
      _
    // Predicated region
    $region34: #{tpu_custom_call.1} parent=1 // pred_check
      _
    $region35: #{tpu_custom_call.1} parent=1 // pred_check_branch
      %195 = sbr.rel (0) target = $region37
    $region36: #{tpu_custom_call.1} parent=1 // pred_region
      %196 = dma.done [#allocation4], 128
    $region37: #{tpu_custom_call.1} parent=1 // pred_fallthru
      _
    // Predicated region
    $region38: #{tpu_custom_call.1} parent=1 // pred_check
      _
    $region39: #{tpu_custom_call.1} parent=1 // pred_check_branch
      %198 = sbr.rel (0) target = $region41
    $region40: #{tpu_custom_call.1} parent=1 // pred_region
      %199 = dma.done [#allocation9], 128
    $region41: #{tpu_custom_call.1} parent=1 // pred_fallthru
      _
    // Predicated region
    $region42: #{tpu_custom_call.1} parent=1 // pred_check
      _
    $region43: #{tpu_custom_call.1} parent=1 // pred_check_branch
      %201 = sbr.rel (0) target = $region45
    $region44: #{tpu_custom_call.1} parent=1 // pred_region
      %202 = dma.done [#allocation9], 128
    $region45: #{tpu_custom_call.1} parent=1 // pred_fallthru
      _
    %203 = vsyncpa [#allocation3], 1
    %204 = vsyncpa [#allocation6], 1
    %205 = vsyncpa [#allocation4], 1
    %206 = vsyncpa [#allocation9], 1

</llo_original>
